<compile_context>
chip_gen: v7x
topology: tpu7x:2x2x1
jax: 0.10.0
libtpu: 0.0.40
codegen_flags: <defaults>
</compile_context>

<pallas_src>
import functools

import jax
import jax.numpy as jnp
from jax.experimental import pallas as pl
from jax.experimental.pallas import tpu as pltpu

KERNEL_SIZE = 7
PAD = (KERNEL_SIZE - 1) // 2


def _round_up(a, b):
    return -(-a // b) * b


def spatial_attention_kernel(x_ref, w_ref, o_ref, *, group_rows, chunk):
    # x_ref: (nb, C, L) VMEM    w_ref: (2*K,) SMEM    o_ref: (nb, L) VMEM
    nb, C, L = x_ref.shape
    inv_c = 1.0 / C

    # Conv weights: 14 scalar SMEM reads, hoisted out of every loop.
    w_avg = [w_ref[k] for k in range(KERNEL_SIZE)]
    w_max = [w_ref[KERNEL_SIZE + k] for k in range(KERNEL_SIZE)]

    # Per-tap edge-validity masks (lane + d in [0, L)), hoisted out of loops.
    lane = jax.lax.broadcasted_iota(jnp.int32, (1, L), 1)
    masks = {}
    for k in range(KERNEL_SIZE):
        d = k - PAD
        if d != 0:
            masks[d] = jnp.logical_and(lane + d >= 0, lane + d < L)

    n_chunks = C // chunk
    rem_c = C - n_chunks * chunk

    def process_group(row_start, g):
        # ---- channel reduction: elementwise partial accumulators across
        #      chunks (VALU), ONE sublane reduction (XLU) at the very end ----
        x0 = x_ref[pl.ds(row_start, g), pl.ds(0, chunk), :]
        ps = x0.astype(jnp.float32)      # (g, chunk, L) running sum (f32)
        pm = x0                          # (g, chunk, L) running max (native dtype)
        if n_chunks > 1:
            def cbody(c, carry):
                ps_c, pm_c = carry
                c0 = pl.multiple_of(c * chunk, chunk)      # tile-aligned start
                xc = x_ref[pl.ds(row_start, g), pl.ds(c0, chunk), :]
                return ps_c + xc.astype(jnp.float32), jnp.maximum(pm_c, xc)
            ps, pm = jax.lax.fori_loop(1, n_chunks, cbody, (ps, pm),
                                       unroll=(n_chunks <= 8))
        s = jnp.sum(ps, axis=1)                              # (g, L)
        m = jnp.max(pm, axis=1).astype(jnp.float32)          # (g, L)
        if rem_c:
            xr = x_ref[pl.ds(row_start, g), pl.ds(n_chunks * chunk, rem_c), :]
            s = s + jnp.sum(xr.astype(jnp.float32), axis=1)
            m = jnp.maximum(m, jnp.max(xr, axis=1).astype(jnp.float32))

        avg = s * inv_c                                      # channel mean

        # ---- 7-tap "same" conv on the stacked (avg; max) slab + sigmoid ----
        stacked = jnp.concatenate([avg, m], axis=0)          # (2g, L)
        row = jax.lax.broadcasted_iota(jnp.int32, (2 * g, 1), 0)
        is_avg = row < g                                     # rows 0..g-1 -> w_avg

        acc = jnp.zeros((2 * g, L), jnp.float32)
        for k in range(KERNEL_SIZE):
            d = k - PAD
            w_col = jnp.where(is_avg, w_avg[k], w_max[k])    # (2g, 1)
            if d == 0:
                acc = acc + w_col * stacked                  # center: no roll/mask
            else:
                sh = jnp.where(masks[d],
                               pltpu.roll(stacked, shift=(-d) % L, axis=1),
                               0.0)
                acc = acc + w_col * sh

        y = acc[:g, :] + acc[g:, :]                          # (g, L)
        o_ref[pl.ds(row_start, g), :] = jax.nn.sigmoid(y).astype(o_ref.dtype)

    # ---- sub-tile the nb-row block into `group_rows`-row groups so the live
    #      vreg set stays ~constant regardless of nb (no spills) --------------
    g = min(group_rows, nb)
    n_full = nb // g
    rem_rows = nb - n_full * g

    if n_full == 1:
        process_group(0, g)
    elif n_full > 1:
        def gbody(i, _):
            process_group(pl.multiple_of(i * g, g), g)
            return 0
        jax.lax.fori_loop(0, n_full, gbody, 0, unroll=(n_full <= 2))
    if rem_rows:
        process_group(n_full * g, rem_rows)


def spatial_attention(x, weight):
    """x: (N, C, L); weight: (1, 2, K) as in nn.Conv1d(2, 1, K, bias=False)."""
    N, C, L = x.shape
    w_flat = weight.reshape(2 * KERNEL_SIZE).astype(jnp.float32)  # 1-D SMEM

    itemsize = jnp.dtype(x.dtype).itemsize
    sub = {4: 8, 2: 16, 1: 32}.get(itemsize, 8)   # sublane packing (rows)
    chunk = min(sub, C)                           # dtype-aware channel chunk
    per_row = C * L * itemsize

    # ---- generation-aware block budget + VMEM limit --------------------------
    try:
        vmem_bytes = int(getattr(pltpu.get_tpu_info(), "vmem_capacity_bytes",
                                 64 << 20))
    except Exception:
        vmem_bytes = 64 << 20
    # ~16 MiB blocks on 128 MiB parts (v5e/v6e), ~8 MiB on v7x's 64 MiB VMEM.
    budget = max(4 << 20, min(16 << 20, vmem_bytes // 8))

    if N <= sub:
        nb = N                                    # whole batch, block == full dim
    else:
        nb = max(1, budget // max(per_row, 1))
        # Keep >= 2 grid steps so v7x's 2 TCs both get work on the parallel axis.
        nb = min(nb, _round_up(pl.cdiv(N, 2), sub))
        # Sublane-align the output block (8,128 rule) unless it covers all of N.
        nb = max(sub, (nb // sub) * sub)
        nb = min(nb, N)
    grid = (pl.cdiv(N, nb),)

    in_block = nb * per_row
    out_block = nb * L * itemsize
    vmem_limit = int(min(vmem_bytes,
                         max(32 << 20, 2 * in_block + 2 * out_block + (16 << 20))))

    cost = pl.CostEstimate(
        flops=int(2 * N * C * L + 28 * N * L),
        transcendentals=int(N * L),
        bytes_accessed=int(N * C * L * itemsize + N * L * itemsize),
    )

    kernel = functools.partial(spatial_attention_kernel,
                               group_rows=sub, chunk=chunk)

    out2d = pl.pallas_call(
        kernel,
        out_shape=jax.ShapeDtypeStruct((N, L), x.dtype),
        grid=grid,
        in_specs=[
            pl.BlockSpec((nb, C, L), lambda i: (i, 0, 0)),   # pipelined x blocks
            pl.BlockSpec(memory_space=pltpu.SMEM),           # conv weights (scalar)
        ],
        out_specs=pl.BlockSpec((nb, L), lambda i: (i, 0)),   # lane-dense 2-D output
        compiler_params=pltpu.CompilerParams(
            dimension_semantics=("parallel",),               # megacore on v7x
            vmem_limit_bytes=vmem_limit,
        ),
        cost_estimate=cost,
    )(x, w_flat)

    return out2d.reshape(N, 1, L)                            # free wrapper reshape


def spatial_attention_reference(x, weight):
    avg = jnp.mean(x, axis=1, keepdims=True)
    mx = jnp.max(x, axis=1, keepdims=True)
    xc = jnp.concatenate([avg, mx], axis=1)                  # (N, 2, L)
    y = jax.lax.conv_general_dilated(
        xc, weight, window_strides=(1,), padding=[(PAD, PAD)],
        dimension_numbers=("NCH", "OIH", "NCH"))
    return jax.nn.sigmoid(y)


if __name__ == "__main__":
    key = jax.random.PRNGKey(0)
    kx, kw = jax.random.split(key)

    # Small but exercises the chunk fori_loop (C=20 -> 2 full chunks + rem 4).
    N, C, L = 2, 20, 128
    x = jax.random.normal(kx, (N, C, L), dtype=jnp.float32)

    # Deterministic Conv1d(2, 1, 7, bias=False) weight (PyTorch-style uniform).
    fan_in = 2 * KERNEL_SIZE
    bound = 1.0 / (fan_in ** 0.5)
    weight = jax.random.uniform(kw, (1, 2, KERNEL_SIZE), dtype=jnp.float32,
                                minval=-bound, maxval=bound)

    out = spatial_attention(x, weight)
    out = jax.block_until_ready(out)

    ref = spatial_attention_reference(x, weight)
    assert out.shape == (N, 1, L), out.shape
    assert jnp.allclose(out, ref, atol=1e-5, rtol=1e-5), \
        float(jnp.max(jnp.abs(out - ref)))

    print("KERNEL_OK")
</pallas_src>

<mosaic_0001>
module attributes {stable_mosaic.version = 11 : i64} {
  func.func @spatial_attention_kernel(%arg0: i32, %arg1: memref<2x20x128xf32, #tpu.memory_space<vmem>>, %arg2: memref<14xf32, #tpu.memory_space<smem>>, %arg3: memref<2x128xf32, #tpu.memory_space<vmem>>) attributes {dimension_semantics = [#tpu.dimension_semantics<parallel>], iteration_bounds = array<i64: 1>, scalar_prefetch = 0 : i64, scratch_operands = 0 : i64, tpu.core_type = #tpu.core_type<tc>, window_params = [{transform_indices = @transform_0, window_bounds = array<i64: 2, 20, 128>}, {transform_indices = @transform_1, window_bounds = array<i64: 14>}, {transform_indices = @transform_2, window_bounds = array<i64: 2, 128>}]} {
    %c0 = arith.constant 0 : index
    %0 = memref.load %arg2[%c0] : memref<14xf32, #tpu.memory_space<smem>>
    %c1 = arith.constant 1 : index
    %1 = memref.load %arg2[%c1] : memref<14xf32, #tpu.memory_space<smem>>
    %c2 = arith.constant 2 : index
    %2 = memref.load %arg2[%c2] : memref<14xf32, #tpu.memory_space<smem>>
    %c3 = arith.constant 3 : index
    %3 = memref.load %arg2[%c3] : memref<14xf32, #tpu.memory_space<smem>>
    %c4 = arith.constant 4 : index
    %4 = memref.load %arg2[%c4] : memref<14xf32, #tpu.memory_space<smem>>
    %c5 = arith.constant 5 : index
    %5 = memref.load %arg2[%c5] : memref<14xf32, #tpu.memory_space<smem>>
    %c6 = arith.constant 6 : index
    %6 = memref.load %arg2[%c6] : memref<14xf32, #tpu.memory_space<smem>>
    %c7 = arith.constant 7 : index
    %7 = memref.load %arg2[%c7] : memref<14xf32, #tpu.memory_space<smem>>
    %c8 = arith.constant 8 : index
    %8 = memref.load %arg2[%c8] : memref<14xf32, #tpu.memory_space<smem>>
    %c9 = arith.constant 9 : index
    %9 = memref.load %arg2[%c9] : memref<14xf32, #tpu.memory_space<smem>>
    %c10 = arith.constant 10 : index
    %10 = memref.load %arg2[%c10] : memref<14xf32, #tpu.memory_space<smem>>
    %c11 = arith.constant 11 : index
    %11 = memref.load %arg2[%c11] : memref<14xf32, #tpu.memory_space<smem>>
    %c12 = arith.constant 12 : index
    %12 = memref.load %arg2[%c12] : memref<14xf32, #tpu.memory_space<smem>>
    %c13 = arith.constant 13 : index
    %13 = memref.load %arg2[%c13] : memref<14xf32, #tpu.memory_space<smem>>
    %14 = tpu.iota {dimensions = array<i32: 1>} : vector<1x128xi32>
    %c-3_i32 = arith.constant -3 : i32
    %15 = vector.broadcast %c-3_i32 : i32 to vector<1x128xi32>
    %16 = arith.addi %14, %15 : vector<1x128xi32>
    %c0_i32 = arith.constant 0 : i32
    %17 = vector.broadcast %c0_i32 : i32 to vector<1x128xi32>
    %18 = arith.cmpi sge, %16, %17 : vector<1x128xi32>
    %c-3_i32_0 = arith.constant -3 : i32
    %19 = vector.broadcast %c-3_i32_0 : i32 to vector<1x128xi32>
    %20 = arith.addi %14, %19 : vector<1x128xi32>
    %c128_i32 = arith.constant 128 : i32
    %21 = vector.broadcast %c128_i32 : i32 to vector<1x128xi32>
    %22 = arith.cmpi slt, %20, %21 : vector<1x128xi32>
    %23 = arith.andi %18, %22 : vector<1x128xi1>
    %c-2_i32 = arith.constant -2 : i32
    %24 = vector.broadcast %c-2_i32 : i32 to vector<1x128xi32>
    %25 = arith.addi %14, %24 : vector<1x128xi32>
    %c0_i32_1 = arith.constant 0 : i32
    %26 = vector.broadcast %c0_i32_1 : i32 to vector<1x128xi32>
    %27 = arith.cmpi sge, %25, %26 : vector<1x128xi32>
    %c-2_i32_2 = arith.constant -2 : i32
    %28 = vector.broadcast %c-2_i32_2 : i32 to vector<1x128xi32>
    %29 = arith.addi %14, %28 : vector<1x128xi32>
    %c128_i32_3 = arith.constant 128 : i32
    %30 = vector.broadcast %c128_i32_3 : i32 to vector<1x128xi32>
    %31 = arith.cmpi slt, %29, %30 : vector<1x128xi32>
    %32 = arith.andi %27, %31 : vector<1x128xi1>
    %c-1_i32 = arith.constant -1 : i32
    %33 = vector.broadcast %c-1_i32 : i32 to vector<1x128xi32>
    %34 = arith.addi %14, %33 : vector<1x128xi32>
    %c0_i32_4 = arith.constant 0 : i32
    %35 = vector.broadcast %c0_i32_4 : i32 to vector<1x128xi32>
    %36 = arith.cmpi sge, %34, %35 : vector<1x128xi32>
    %c-1_i32_5 = arith.constant -1 : i32
    %37 = vector.broadcast %c-1_i32_5 : i32 to vector<1x128xi32>
    %38 = arith.addi %14, %37 : vector<1x128xi32>
    %c128_i32_6 = arith.constant 128 : i32
    %39 = vector.broadcast %c128_i32_6 : i32 to vector<1x128xi32>
    %40 = arith.cmpi slt, %38, %39 : vector<1x128xi32>
    %41 = arith.andi %36, %40 : vector<1x128xi1>
    %c1_i32 = arith.constant 1 : i32
    %42 = vector.broadcast %c1_i32 : i32 to vector<1x128xi32>
    %43 = arith.addi %14, %42 : vector<1x128xi32>
    %c0_i32_7 = arith.constant 0 : i32
    %44 = vector.broadcast %c0_i32_7 : i32 to vector<1x128xi32>
    %45 = arith.cmpi sge, %43, %44 : vector<1x128xi32>
    %c1_i32_8 = arith.constant 1 : i32
    %46 = vector.broadcast %c1_i32_8 : i32 to vector<1x128xi32>
    %47 = arith.addi %14, %46 : vector<1x128xi32>
    %c128_i32_9 = arith.constant 128 : i32
    %48 = vector.broadcast %c128_i32_9 : i32 to vector<1x128xi32>
    %49 = arith.cmpi slt, %47, %48 : vector<1x128xi32>
    %50 = arith.andi %45, %49 : vector<1x128xi1>
    %c2_i32 = arith.constant 2 : i32
    %51 = vector.broadcast %c2_i32 : i32 to vector<1x128xi32>
    %52 = arith.addi %14, %51 : vector<1x128xi32>
    %c0_i32_10 = arith.constant 0 : i32
    %53 = vector.broadcast %c0_i32_10 : i32 to vector<1x128xi32>
    %54 = arith.cmpi sge, %52, %53 : vector<1x128xi32>
    %c2_i32_11 = arith.constant 2 : i32
    %55 = vector.broadcast %c2_i32_11 : i32 to vector<1x128xi32>
    %56 = arith.addi %14, %55 : vector<1x128xi32>
    %c128_i32_12 = arith.constant 128 : i32
    %57 = vector.broadcast %c128_i32_12 : i32 to vector<1x128xi32>
    %58 = arith.cmpi slt, %56, %57 : vector<1x128xi32>
    %59 = arith.andi %54, %58 : vector<1x128xi1>
    %c3_i32 = arith.constant 3 : i32
    %60 = vector.broadcast %c3_i32 : i32 to vector<1x128xi32>
    %61 = arith.addi %14, %60 : vector<1x128xi32>
    %c0_i32_13 = arith.constant 0 : i32
    %62 = vector.broadcast %c0_i32_13 : i32 to vector<1x128xi32>
    %63 = arith.cmpi sge, %61, %62 : vector<1x128xi32>
    %c3_i32_14 = arith.constant 3 : i32
    %64 = vector.broadcast %c3_i32_14 : i32 to vector<1x128xi32>
    %65 = arith.addi %14, %64 : vector<1x128xi32>
    %c128_i32_15 = arith.constant 128 : i32
    %66 = vector.broadcast %c128_i32_15 : i32 to vector<1x128xi32>
    %67 = arith.cmpi slt, %65, %66 : vector<1x128xi32>
    %68 = arith.andi %63, %67 : vector<1x128xi1>
    %c0_16 = arith.constant 0 : index
    %c0_17 = arith.constant 0 : index
    %c0_18 = arith.constant 0 : index
    %69 = vector.load %arg1[%c0_16, %c0_17, %c0_18] : memref<2x20x128xf32, #tpu.memory_space<vmem>>, vector<2x8x128xf32>
    %c1_i32_19 = arith.constant 1 : i32
    %c8_i32 = arith.constant 8 : i32
    %70 = arith.muli %c1_i32_19, %c8_i32 : i32
    %71 = tpu.assume_multiple %70, 8 : i32
    %c0_20 = arith.constant 0 : index
    %72 = arith.index_cast %71 : i32 to index
    %c0_21 = arith.constant 0 : index
    %73 = vector.load %arg1[%c0_20, %72, %c0_21] : memref<2x20x128xf32, #tpu.memory_space<vmem>>, vector<2x8x128xf32>
    %74 = arith.addf %69, %73 : vector<2x8x128xf32>
    %75 = arith.maximumf %69, %73 : vector<2x8x128xf32>
    %c1_i32_22 = arith.constant 1 : i32
    %cst = arith.constant dense<0.000000e+00> : vector<2x128xf32>
    %76 = vector.multi_reduction <add>, %74, %cst [1] : vector<2x8x128xf32> to vector<2x128xf32>
    %cst_23 = arith.constant dense<0xFF800000> : vector<2x128xf32>
    %77 = vector.multi_reduction <maximumf>, %75, %cst_23 [1] : vector<2x8x128xf32> to vector<2x128xf32>
    %c0_24 = arith.constant 0 : index
    %c16 = arith.constant 16 : index
    %c0_25 = arith.constant 0 : index
    %78 = vector.load %arg1[%c0_24, %c16, %c0_25] : memref<2x20x128xf32, #tpu.memory_space<vmem>>, vector<2x4x128xf32>
    %cst_26 = arith.constant dense<0.000000e+00> : vector<2x128xf32>
    %79 = vector.multi_reduction <add>, %78, %cst_26 [1] : vector<2x4x128xf32> to vector<2x128xf32>
    %80 = arith.addf %76, %79 : vector<2x128xf32>
    %cst_27 = arith.constant dense<0xFF800000> : vector<2x128xf32>
    %81 = vector.multi_reduction <maximumf>, %78, %cst_27 [1] : vector<2x4x128xf32> to vector<2x128xf32>
    %82 = arith.maximumf %77, %81 : vector<2x128xf32>
    %cst_28 = arith.constant 5.000000e-02 : f32
    %83 = vector.broadcast %cst_28 : f32 to vector<2x128xf32>
    %84 = arith.mulf %80, %83 : vector<2x128xf32>
    %85 = tpu.concatenate %84, %82 in 0 : vector<2x128xf32>, vector<2x128xf32> -> vector<4x128xf32>
    %86 = tpu.iota {dimensions = array<i32: 0>} : vector<4x1xi32>
    %c2_i32_29 = arith.constant 2 : i32
    %87 = vector.broadcast %c2_i32_29 : i32 to vector<4x1xi32>
    %88 = arith.cmpi slt, %86, %87 : vector<4x1xi32>
    %cst_30 = arith.constant 0.000000e+00 : f32
    %89 = vector.broadcast %cst_30 : f32 to vector<4x128xf32>
    %90 = vector.broadcast %0 : f32 to vector<4x1xf32>
    %91 = vector.broadcast %7 : f32 to vector<4x1xf32>
    %92 = arith.select %88, %90, %91 : vector<4x1xi1>, vector<4x1xf32>
    %c3_i32_31 = arith.constant 3 : i32
    %93 = tpu.dynamic_rotate %85 by %c3_i32_31 dim 1 : vector<4x128xf32>, i32 -> vector<4x128xf32>
    %cst_32 = arith.constant 0.000000e+00 : f32
    %94 = vector.shape_cast %23 : vector<1x128xi1> to vector<1x128xi1>
    %95 = vector.broadcast %94 : vector<1x128xi1> to vector<4x128xi1>
    %96 = vector.broadcast %cst_32 : f32 to vector<4x128xf32>
    %97 = arith.select %95, %93, %96 : vector<4x128xi1>, vector<4x128xf32>
    %98 = vector.broadcast %92 : vector<4x1xf32> to vector<4x128xf32>
    %99 = arith.mulf %98, %97 : vector<4x128xf32>
    %100 = arith.addf %89, %99 : vector<4x128xf32>
    %101 = vector.broadcast %1 : f32 to vector<4x1xf32>
    %102 = vector.broadcast %8 : f32 to vector<4x1xf32>
    %103 = arith.select %88, %101, %102 : vector<4x1xi1>, vector<4x1xf32>
    %c2_i32_33 = arith.constant 2 : i32
    %104 = tpu.dynamic_rotate %85 by %c2_i32_33 dim 1 : vector<4x128xf32>, i32 -> vector<4x128xf32>
    %cst_34 = arith.constant 0.000000e+00 : f32
    %105 = vector.shape_cast %32 : vector<1x128xi1> to vector<1x128xi1>
    %106 = vector.broadcast %105 : vector<1x128xi1> to vector<4x128xi1>
    %107 = vector.broadcast %cst_34 : f32 to vector<4x128xf32>
    %108 = arith.select %106, %104, %107 : vector<4x128xi1>, vector<4x128xf32>
    %109 = vector.broadcast %103 : vector<4x1xf32> to vector<4x128xf32>
    %110 = arith.mulf %109, %108 : vector<4x128xf32>
    %111 = arith.addf %100, %110 : vector<4x128xf32>
    %112 = vector.broadcast %2 : f32 to vector<4x1xf32>
    %113 = vector.broadcast %9 : f32 to vector<4x1xf32>
    %114 = arith.select %88, %112, %113 : vector<4x1xi1>, vector<4x1xf32>
    %c1_i32_35 = arith.constant 1 : i32
    %115 = tpu.dynamic_rotate %85 by %c1_i32_35 dim 1 : vector<4x128xf32>, i32 -> vector<4x128xf32>
    %cst_36 = arith.constant 0.000000e+00 : f32
    %116 = vector.shape_cast %41 : vector<1x128xi1> to vector<1x128xi1>
    %117 = vector.broadcast %116 : vector<1x128xi1> to vector<4x128xi1>
    %118 = vector.broadcast %cst_36 : f32 to vector<4x128xf32>
    %119 = arith.select %117, %115, %118 : vector<4x128xi1>, vector<4x128xf32>
    %120 = vector.broadcast %114 : vector<4x1xf32> to vector<4x128xf32>
    %121 = arith.mulf %120, %119 : vector<4x128xf32>
    %122 = arith.addf %111, %121 : vector<4x128xf32>
    %123 = vector.broadcast %3 : f32 to vector<4x1xf32>
    %124 = vector.broadcast %10 : f32 to vector<4x1xf32>
    %125 = arith.select %88, %123, %124 : vector<4x1xi1>, vector<4x1xf32>
    %126 = vector.broadcast %125 : vector<4x1xf32> to vector<4x128xf32>
    %127 = arith.mulf %126, %85 : vector<4x128xf32>
    %128 = arith.addf %122, %127 : vector<4x128xf32>
    %129 = vector.broadcast %4 : f32 to vector<4x1xf32>
    %130 = vector.broadcast %11 : f32 to vector<4x1xf32>
    %131 = arith.select %88, %129, %130 : vector<4x1xi1>, vector<4x1xf32>
    %c127_i32 = arith.constant 127 : i32
    %132 = tpu.dynamic_rotate %85 by %c127_i32 dim 1 : vector<4x128xf32>, i32 -> vector<4x128xf32>
    %cst_37 = arith.constant 0.000000e+00 : f32
    %133 = vector.shape_cast %50 : vector<1x128xi1> to vector<1x128xi1>
    %134 = vector.broadcast %133 : vector<1x128xi1> to vector<4x128xi1>
    %135 = vector.broadcast %cst_37 : f32 to vector<4x128xf32>
    %136 = arith.select %134, %132, %135 : vector<4x128xi1>, vector<4x128xf32>
    %137 = vector.broadcast %131 : vector<4x1xf32> to vector<4x128xf32>
    %138 = arith.mulf %137, %136 : vector<4x128xf32>
    %139 = arith.addf %128, %138 : vector<4x128xf32>
    %140 = vector.broadcast %5 : f32 to vector<4x1xf32>
    %141 = vector.broadcast %12 : f32 to vector<4x1xf32>
    %142 = arith.select %88, %140, %141 : vector<4x1xi1>, vector<4x1xf32>
    %c126_i32 = arith.constant 126 : i32
    %143 = tpu.dynamic_rotate %85 by %c126_i32 dim 1 : vector<4x128xf32>, i32 -> vector<4x128xf32>
    %cst_38 = arith.constant 0.000000e+00 : f32
    %144 = vector.shape_cast %59 : vector<1x128xi1> to vector<1x128xi1>
    %145 = vector.broadcast %144 : vector<1x128xi1> to vector<4x128xi1>
    %146 = vector.broadcast %cst_38 : f32 to vector<4x128xf32>
    %147 = arith.select %145, %143, %146 : vector<4x128xi1>, vector<4x128xf32>
    %148 = vector.broadcast %142 : vector<4x1xf32> to vector<4x128xf32>
    %149 = arith.mulf %148, %147 : vector<4x128xf32>
    %150 = arith.addf %139, %149 : vector<4x128xf32>
    %151 = vector.broadcast %6 : f32 to vector<4x1xf32>
    %152 = vector.broadcast %13 : f32 to vector<4x1xf32>
    %153 = arith.select %88, %151, %152 : vector<4x1xi1>, vector<4x1xf32>
    %c125_i32 = arith.constant 125 : i32
    %154 = tpu.dynamic_rotate %85 by %c125_i32 dim 1 : vector<4x128xf32>, i32 -> vector<4x128xf32>
    %cst_39 = arith.constant 0.000000e+00 : f32
    %155 = vector.shape_cast %68 : vector<1x128xi1> to vector<1x128xi1>
    %156 = vector.broadcast %155 : vector<1x128xi1> to vector<4x128xi1>
    %157 = vector.broadcast %cst_39 : f32 to vector<4x128xf32>
    %158 = arith.select %156, %154, %157 : vector<4x128xi1>, vector<4x128xf32>
    %159 = vector.broadcast %153 : vector<4x1xf32> to vector<4x128xf32>
    %160 = arith.mulf %159, %158 : vector<4x128xf32>
    %161 = arith.addf %150, %160 : vector<4x128xf32>
    %162 = vector.extract_strided_slice %161 {offsets = [0, 0], sizes = [2, 128], strides = [1, 1]} : vector<4x128xf32> to vector<2x128xf32>
    %163 = vector.extract_strided_slice %161 {offsets = [2, 0], sizes = [2, 128], strides = [1, 1]} : vector<4x128xf32> to vector<2x128xf32>
    %164 = arith.addf %162, %163 : vector<2x128xf32>
    %165 = arith.negf %164 : vector<2x128xf32>
    %166 = math.exp %165 : vector<2x128xf32>
    %cst_40 = arith.constant 1.000000e+00 : f32
    %167 = vector.broadcast %cst_40 : f32 to vector<2x128xf32>
    %168 = arith.addf %167, %166 : vector<2x128xf32>
    %169 = arith.divf %167, %168 : vector<2x128xf32>
    %c0_41 = arith.constant 0 : index
    %c0_42 = arith.constant 0 : index
    %170 = vector.load %arg3[%c0_41, %c0_42] : memref<2x128xf32, #tpu.memory_space<vmem>>, vector<2x128xf32>
    tpu.vector_store %arg3[%c0_41, %c0_42], %169 {strides = array<i32>} : memref<2x128xf32, #tpu.memory_space<vmem>>, vector<2x128xf32>,
    return
  }
  func.func @transform_0(%arg0: i32) -> (i32, i32, i32) {
    %c0_i32 = arith.constant 0 : i32
    %c0_i32_0 = arith.constant 0 : i32
    %c0_i32_1 = arith.constant 0 : i32
    return %arg0, %c0_i32, %c0_i32_0 : i32, i32, i32
  }
  func.func @transform_1(%arg0: i32) -> i32 {
    %c0_i32 = arith.constant 0 : i32
    %c0_i32_0 = arith.constant 0 : i32
    return %c0_i32 : i32
  }
  func.func @transform_2(%arg0: i32) -> (i32, i32) {
    %c0_i32 = arith.constant 0 : i32
    %c0_i32_0 = arith.constant 0 : i32
    return %arg0, %c0_i32 : i32, i32
  }
}

</mosaic_0001>

<llo_original>
// kernel: tpu_custom_call.1
$region0: #{tpu_custom_call.1}
  #allocation0 [shape = 'u32[]', space=smem, size = 0x4, offset = 0x4, fixed_abs, tag = 'smem constant byte address 0x4 - core index']
  #allocation1 [shape = 'u32[144,128]{1,0:T(1,128)}', space=vmem, size = 0x12000, scoped, tag = 'internal scratch']
  %s0 = inlined_call_operand.vmem [shape: f32[2,20,128], index: 0, kind: input, shape index: {}]
  %s1 = inlined_call_operand.vmem [shape: f32[14], index: 1, kind: input, shape index: {}]
  %s2 = inlined_call_operand.hbm [shape: f32[2,128], index: 2, kind: output, shape index: {}]
  %s3 = sld [smem:[#allocation0]]
  $region22: #{tpu_custom_call.1} parent=0
    _
  %s5 = ssub.s32 1, %s3
  %s6 = scalar_select 0, %s5, %s3
  $region1: #{tpu_custom_call.1} parent=0
    #allocation2 [shape = 'u8[512]{0}', space=smem, size = 0x200, scoped, tag = 'input window, operand 1, single buffered']
    #allocation3 [shape = 's32[1]{0}', space=sflag, size = 0x4, scoped, tag = 'scoped memory for tpu_custom_call.1']
    #allocation4 [shape = 's32[1]{0}', space=sflag, size = 0x4, scoped, tag = 'scoped memory for tpu_custom_call.1']
    #allocation5 [shape = 'u8[1024]{0}', space=vmem, size = 0x400, scoped, tag = 'output window, operand 0, single buffered']
    %7 = vsyncpa [#allocation4], 0
    %8 = vsyncpa [#allocation3], 0
    // Predicated region
    $region2: #{tpu_custom_call.1} parent=1 // pred_check
      _
    $region3: #{tpu_custom_call.1} parent=1 // pred_check_branch
      %10 = sbr.rel (0) target = $region5
    $region4: #{tpu_custom_call.1} parent=1 // pred_region
      _
    $region5: #{tpu_custom_call.1} parent=1 // pred_fallthru
      _
    // Predicated region
    $region6: #{tpu_custom_call.1} parent=1 // pred_check
      _
    $region7: #{tpu_custom_call.1} parent=1 // pred_check_branch
      %12 = sbr.rel (0) target = $region9
    $region8: #{tpu_custom_call.1} parent=1 // pred_region
      %s14 = ssub.s32 16, 16
      %15 = vsyncadd [#allocation4], %s14
      %s17 = sshll.u32 %s1, 4
      %s18 = int_to_ptr.vmem [resolvable:$true] %s17
      %20 = dma.vmem_to_smem %s18, 16, [#allocation2], [#allocation4]
    $region9: #{tpu_custom_call.1} parent=1 // pred_fallthru
      _
    // Predicated region
    $region10: #{tpu_custom_call.1} parent=1 // pred_check
      _
    $region11: #{tpu_custom_call.1} parent=1 // pred_check_branch
      %22 = sbr.rel (0) target = $region13
    $region12: #{tpu_custom_call.1} parent=1 // pred_region
      %23 = dma.done [#allocation4], 16
    $region13: #{tpu_custom_call.1} parent=1 // pred_fallthru
      _
    %24 = sfence
    %s25 = sld [smem:[#allocation2]]
    %s26 = sld [smem:[#allocation2 + $0x1]]
    %s27 = sld [smem:[#allocation2 + $0x2]]
    %s28 = sld [smem:[#allocation2 + $0x3]]
    %s29 = sld [smem:[#allocation2 + $0x4]]
    %s30 = sld [smem:[#allocation2 + $0x5]]
    %s31 = sld [smem:[#allocation2 + $0x6]]
    %s32 = sld [smem:[#allocation2 + $0x7]]
    %s33 = sld [smem:[#allocation2 + $0x8]]
    %s34 = sld [smem:[#allocation2 + $0x9]]
    %s35 = sld [smem:[#allocation2 + $0xa]]
    %s36 = sld [smem:[#allocation2 + $0xb]]
    %s37 = sld [smem:[#allocation2 + $0xc]]
    %s38 = sld [smem:[#allocation2 + $0xd]]
    %v39 = vlaneseq
    %v40 = vand.u32 %v39, 127
    %v41 = vadd.s32 %v40, 4294967293
    %vm42 = vcmp.ge.s32.totalorder %v41, 0
    %vm43 = vcmp.lt.s32.totalorder %v41, 128
    %vm44 = vmand %vm42, %vm43
    %v45 = vadd.s32 %v40, 4294967294
    %vm46 = vcmp.ge.s32.totalorder %v45, 0
    %vm47 = vcmp.lt.s32.totalorder %v45, 128
    %vm48 = vmand %vm46, %vm47
    %v49 = vadd.s32 %v40, 4294967295
    %vm50 = vcmp.ge.s32.totalorder %v49, 0
    %vm51 = vcmp.lt.s32.totalorder %v49, 128
    %vm52 = vmand %vm50, %vm51
    %v53 = vadd.s32 %v40, 1
    %vm54 = vcmp.ge.s32.totalorder %v53, 0
    %vm55 = vcmp.lt.s32.totalorder %v53, 128
    %vm56 = vmand %vm54, %vm55
    %v57 = vadd.s32 %v40, 2
    %vm58 = vcmp.ge.s32.totalorder %v57, 0
    %vm59 = vcmp.lt.s32.totalorder %v57, 128
    %vm60 = vmand %vm58, %vm59
    %v61 = vadd.s32 %v40, 3
    %vm62 = vcmp.ge.s32.totalorder %v61, 0
    %vm63 = vcmp.lt.s32.totalorder %v61, 128
    %vm64 = vmand %vm62, %vm63
    %v65 = vld [vmem:[%s0] sm:$0xff]
    %v66 = vld [vmem:[%s0 + $0x18] sm:$0xff]
    %s67 = scalar_lea.vmem %s0, 8
    %v68 = vld [vmem:[%s67] sm:$0xff]
    %v69 = vld [vmem:[%s67 + $0x18] sm:$0xff]
    %v70 = vadd.f32 %v65, %v68
    %v71 = vadd.f32 %v66, %v69
    %v72 = vmax.f32 %v65, %v68
    %v73 = vmax.f32 %v66, %v69
    %v74 = vrot.slane %v70, 4
    %v75 = vadd.f32 %v70, %v74
    %v76 = vrot.slane %v75, 2
    %v77 = vadd.f32 %v75, %v76
    %v78 = vrot.slane %v77, 1
    %v79 = vadd.f32 %v77, %v78
    %v80 = vrot.slane %v71, 4
    %v81 = vadd.f32 %v71, %v80
    %v82 = vrot.slane %v81, 2
    %v83 = vadd.f32 %v81, %v82
    %v84 = vrot.slane %v83, 1
    %v85 = vadd.f32 %v83, %v84
    %v86 = vrot.slane %v72, 4
    %v87 = vmax.f32 %v72, %v86
    %v88 = vrot.slane %v87, 2
    %v89 = vmax.f32 %v87, %v88
    %v90 = vrot.slane %v89, 1
    %v91 = vmax.f32 %v89, %v90
    %v92 = vrot.slane %v73, 4
    %v93 = vmax.f32 %v73, %v92
    %v94 = vrot.slane %v93, 2
    %v95 = vmax.f32 %v93, %v94
    %v96 = vrot.slane %v95, 1
    %v97 = vmax.f32 %v95, %v96
    %v98 = vld [vmem:[%s0 + $0x10] sm:$0xf]
    %v99 = vld [vmem:[%s0 + $0x28] sm:$0xf]
    %vm100 = vcmask 1043456
    %v101 = vsel %vm100, %v98, 0.0
    %v102 = vrot.slane %v101, 4
    %v103 = vadd.f32 %v101, %v102
    %v104 = vrot.slane %v103, 2
    %v105 = vadd.f32 %v103, %v104
    %v106 = vrot.slane %v105, 1
    %v107 = vadd.f32 %v105, %v106
    %v108 = vsel %vm100, %v99, 0.0
    %v109 = vrot.slane %v108, 4
    %v110 = vadd.f32 %v108, %v109
    %v111 = vrot.slane %v110, 2
    %v112 = vadd.f32 %v110, %v111
    %v113 = vrot.slane %v112, 1
    %v114 = vadd.f32 %v112, %v113
    %v115 = vadd.f32 %v79, %v107
    %v116 = vadd.f32 %v85, %v114
    %v117 = vsel %vm100, %v98, -inf
    %v118 = vrot.slane %v117, 4
    %v119 = vmax.f32 %v117, %v118
    %v120 = vrot.slane %v119, 2
    %v121 = vmax.f32 %v119, %v120
    %v122 = vrot.slane %v121, 1
    %v123 = vmax.f32 %v121, %v122
    %v124 = vsel %vm100, %v99, -inf
    %v125 = vrot.slane %v124, 4
    %v126 = vmax.f32 %v124, %v125
    %v127 = vrot.slane %v126, 2
    %v128 = vmax.f32 %v126, %v127
    %v129 = vrot.slane %v128, 1
    %v130 = vmax.f32 %v128, %v129
    %v131 = vmax.f32 %v91, %v123
    %v132 = vmax.f32 %v97, %v130
    %v133 = vmul.f32 %v115, 0.05
    %v134 = vmul.f32 %v116, 0.05
    %vm137 = vcmask 1041409
    %v138 = vsel %vm137, %v134, %v133
    %vm142 = vcmask 1043459
    %v143 = vsel %vm142, %v132, %v131
    %vm145 = vcmask 1041408
    %v146 = vsel %vm145, %v138, %v143
    %v147 = vlaneseq
    %v148 = vshrl.u32 %v147, 7
    %vm149 = vcmp.lt.s32.totalorder %v148, 2
    %v150 = vstv %s25
    %v151 = vstv %s32
    %v152 = vsel %vm149, %v150, %v151
    %153 = vrot.lane.b32.xlu0 %v146, 3
    %v154 = vpop.permute.xlu0 %153
    %v155 = vsel %vm44, 1, 0
    %vm156 = vcmp.eq.s32.totalorder %v155, 1
    %v157 = vsel %vm156, %v154, 0.0
    %v158 = vmul.f32 %v152, %v157
    %v159 = vadd.f32 %v158, 0.0
    %v160 = vstv %s26
    %v161 = vstv %s33
    %v162 = vsel %vm149, %v160, %v161
    %163 = vrot.lane.b32.xlu0 %v146, 2
    %v164 = vpop.permute.xlu0 %163
    %v165 = vsel %vm48, 1, 0
    %vm166 = vcmp.eq.s32.totalorder %v165, 1
    %v167 = vsel %vm166, %v164, 0.0
    %v168 = vmul.f32 %v162, %v167
    %v169 = vadd.f32 %v159, %v168
    %v170 = vstv %s27
    %v171 = vstv %s34
    %v172 = vsel %vm149, %v170, %v171
    %173 = vrot.lane.b32.xlu0 %v146, 1
    %v174 = vpop.permute.xlu0 %173
    %v175 = vsel %vm52, 1, 0
    %vm176 = vcmp.eq.s32.totalorder %v175, 1
    %v177 = vsel %vm176, %v174, 0.0
    %v178 = vmul.f32 %v172, %v177
    %v179 = vadd.f32 %v169, %v178
    %v180 = vstv %s28
    %v181 = vstv %s35
    %v182 = vsel %vm149, %v180, %v181
    %v183 = vmul.f32 %v182, %v146
    %v184 = vadd.f32 %v179, %v183
    %v185 = vstv %s29
    %v186 = vstv %s36
    %v187 = vsel %vm149, %v185, %v186
    %188 = vrot.lane.b32.xlu0 %v146, 127
    %v189 = vpop.permute.xlu0 %188
    %v190 = vsel %vm56, 1, 0
    %vm191 = vcmp.eq.s32.totalorder %v190, 1
    %v192 = vsel %vm191, %v189, 0.0
    %v193 = vmul.f32 %v187, %v192
    %v194 = vadd.f32 %v184, %v193
    %v195 = vstv %s30
    %v196 = vstv %s37
    %v197 = vsel %vm149, %v195, %v196
    %198 = vrot.lane.b32.xlu0 %v146, 126
    %v199 = vpop.permute.xlu0 %198
    %v200 = vsel %vm60, 1, 0
    %vm201 = vcmp.eq.s32.totalorder %v200, 1
    %v202 = vsel %vm201, %v199, 0.0
    %v203 = vmul.f32 %v197, %v202
    %v204 = vadd.f32 %v194, %v203
    %v205 = vstv %s31
    %v206 = vstv %s38
    %v207 = vsel %vm149, %v205, %v206
    %208 = vrot.lane.b32.xlu0 %v146, 125
    %v209 = vpop.permute.xlu0 %208
    %v210 = vsel %vm64, 1, 0
    %vm211 = vcmp.eq.s32.totalorder %v210, 1
    %v212 = vsel %vm211, %v209, 0.0
    %v213 = vmul.f32 %v207, %v212
    %v214 = vadd.f32 %v204, %v213
    %v216 = vrot.slane %v214, 2
    %v218 = vadd.f32 %v214, %v216
    %v219 = vxor.u32 %v218, 2147483648
    %v220 = vmul.f32 %v219, 1.442695
    %v221 = vpow.pop %v220
    %v222 = vadd.f32 %v221, 1.0
    %v223 = vrcp.pop %v222
    %v224 = vmul.f32 1.0, %v223
    %225 = vst [vmem:[#allocation5] sm:$0x3] %v224
    // Predicated region
    $region14: #{tpu_custom_call.1} parent=1 // pred_check
      _
    $region15: #{tpu_custom_call.1} parent=1 // pred_check_branch
      %227 = sbr.rel (0) target = $region17
    $region16: #{tpu_custom_call.1} parent=1 // pred_region
      %s229 = ssub.s32 32, 32
      %230 = vsyncadd [#allocation3], %s229
      %s232 = sshll.u32 [#allocation5], 4
      %s233 = int_to_ptr.vmem [resolvable:$true] %s232
      %235 = dma.vmem_to_hbm [thread:$0]  %s233, 32, %s2, [#allocation3]
    $region17: #{tpu_custom_call.1} parent=1 // pred_fallthru
      _
    // Predicated region
    $region18: #{tpu_custom_call.1} parent=1 // pred_check
      _
    $region19: #{tpu_custom_call.1} parent=1 // pred_check_branch
      %237 = sbr.rel (0) target = $region21
    $region20: #{tpu_custom_call.1} parent=1 // pred_region
      %238 = dma.done [#allocation3], 32
    $region21: #{tpu_custom_call.1} parent=1 // pred_fallthru
      _
    %239 = vsyncpa [#allocation3], 1
    %240 = vsyncpa [#allocation4], 1

</llo_original>
